<compile_context>
chip_gen: v7x
topology: tpu7x:2x2x1
jax: 0.10.0
libtpu: 0.0.40
codegen_flags: <defaults>
</compile_context>

<pallas_src>
import functools

import jax
import jax.numpy as jnp
from jax.experimental import pallas as pl
from jax.experimental.pallas import tpu as pltpu


# ----------------------------------------------------------------------------
# Kernel
# ----------------------------------------------------------------------------
def _encode_value_kernel(frame_ref, masks_ref, out_ref, *,
                         single_object: bool, num_objects: int):
    """One (batch, row-tile) block per grid step.

    frame_ref : (1, 3, th, W)         RGB frame row-tile
    masks_ref : (1, K, th, W)         per-object mask row-tile
    out_ref   : (1, K, 3+M, th, W)    M = 1 if single_object else 2
    """
    k = num_objects
    odt = out_ref.dtype

    frame = frame_ref[0]                      # (3, th, W), single dense load
    masks = masks_ref[0]                      # (K, th, W), single dense load
    frame_o = frame.astype(odt)

    total = None
    if (not single_object) and k > 1:
        # O(K) adds: sum all masks once, then others_i = total - own below.
        total = masks[0]
        for j in range(1, k):
            total = total + masks[j]

    for i in range(k):
        # RGB channels: re-store the same frame registers for every object
        # (no K-way broadcast materialized); each channel is a dense (th, W)
        # slab store because channels are outer block dims.
        out_ref[0, i, 0:3, :, :] = frame_o
        # own mask channel
        out_ref[0, i, 3, :, :] = masks[i].astype(odt)

        if single_object:
            continue

        if k == 1:
            out_ref[0, i, 4, :, :] = jnp.zeros(masks.shape[1:], odt)
        else:
            out_ref[0, i, 4, :, :] = (total - masks[i]).astype(odt)


# ----------------------------------------------------------------------------
# Tile selection (byte-budget aware)
# ----------------------------------------------------------------------------
def _pick_row_tile(h: int, w: int, k: int, cout: int,
                   in_itemsize: int, out_itemsize: int,
                   budget_bytes: int) -> int:
    """Largest row-tile (multiple of 8, or full H) whose double-buffered
    working set (inputs + output blocks) stays within budget_bytes."""
    per_row = 2 * ((3 + k) * w * in_itemsize + cout * k * w * out_itemsize)
    max_rows = max(1, budget_bytes // per_row)
    if max_rows >= h:
        return h                       # whole frame fits: single row-tile
    th = (max_rows // 8) * 8
    if th >= 8:
        return min(th, h)
    # Budget smaller than one 8-row tile (extreme W / K): use the minimum
    # legal sublane tile; correctness is unaffected.
    return 8 if h >= 8 else h


# ----------------------------------------------------------------------------
# Wrapper
# ----------------------------------------------------------------------------
def encode_value(frame, masks, *, single_object: bool = False,
                 out_dtype=None, vmem_budget_bytes: int = 24 << 20):
    """JointFormer.encode_value.

    frame : [bs, 3, H, W]
    masks : [bs, K, H, W]
    returns frames_with_masks : [bs, K, 3+M, H, W]  (M = 1 if single_object else 2)
    """
    bs, c3, h, w = frame.shape
    assert c3 == 3, f"frame must have 3 channels, got {c3}"
    bs2, k, h2, w2 = masks.shape
    assert (bs2, h2, w2) == (bs, h, w), "frame/masks shape mismatch"

    m = 1 if single_object else 2
    cout = 3 + m
    if out_dtype is None:
        # Matches the PyTorch concat promotion; pass bf16 explicitly in
        # production to halve HBM write traffic.
        out_dtype = jnp.result_type(frame.dtype, masks.dtype)

    in_itemsize = max(jnp.dtype(frame.dtype).itemsize,
                      jnp.dtype(masks.dtype).itemsize)
    out_itemsize = jnp.dtype(out_dtype).itemsize

    th = _pick_row_tile(h, w, k, cout, in_itemsize, out_itemsize,
                        vmem_budget_bytes)
    n_row_tiles = pl.cdiv(h, th)       # partial last block is handled by Pallas

    working_set = 2 * ((3 + k) * th * w * in_itemsize
                       + cout * k * th * w * out_itemsize)
    # Scoped VMEM limit: cover the working set with headroom, but stay well
    # inside v7x's 64 MiB physical VMEM.
    vmem_limit = int(min(max(working_set + (8 << 20), 16 << 20), 48 << 20))

    kernel = functools.partial(_encode_value_kernel,
                               single_object=single_object, num_objects=k)

    out = pl.pallas_call(
        kernel,
        out_shape=jax.ShapeDtypeStruct((bs, k, cout, h, w), out_dtype),
        grid_spec=pltpu.PrefetchScalarGridSpec(
            num_scalar_prefetch=0,
            grid=(bs, n_row_tiles),
            in_specs=[
                pl.BlockSpec((1, 3, th, w), lambda b, r: (b, 0, r, 0)),
                pl.BlockSpec((1, k, th, w), lambda b, r: (b, 0, r, 0)),
            ],
            out_specs=pl.BlockSpec((1, k, cout, th, w),
                                   lambda b, r: (b, 0, 0, r, 0)),
        ),
        compiler_params=pltpu.CompilerParams(
            dimension_semantics=("parallel", "parallel"),
            vmem_limit_bytes=vmem_limit),
    )(frame, masks)

    return out


# ----------------------------------------------------------------------------
# Pure-JAX reference (mirrors the PyTorch code) for verification
# ----------------------------------------------------------------------------
def encode_value_reference(frame, masks, *, single_object: bool = False):
    bs, _, h, w = frame.shape
    k = masks.shape[1]
    if k != 1:
        others = jnp.stack(
            [jnp.sum(masks[:, [j for j in range(k) if j != i]], axis=1)
             for i in range(k)], axis=1)
    else:
        others = jnp.zeros_like(masks)
    if single_object:
        masks_s = masks[:, :, None]                       # [bs,K,1,H,W]
    else:
        masks_s = jnp.stack([masks, others], axis=2)      # [bs,K,2,H,W]
    frames = jnp.broadcast_to(frame[:, None], (bs, k, 3, h, w))
    return jnp.concatenate([frames, masks_s], axis=2)


# ----------------------------------------------------------------------------
# Minimal JointFormer stand-in
# ----------------------------------------------------------------------------
class JointFormerJax:
    """Only 'encode_value' and 'get_cls_token' are supported; the remaining
    modes require convvit_base_patch16 / Decoder which are not defined in the
    provided source."""

    def __init__(self, config):
        self.single_object = config.get("single_object", False)
        config.setdefault("update_block_depth", 2)
        config.setdefault("enhance_block_depth", 1)
        key = jax.random.PRNGKey(42)
        self.cls_token = 0.02 * jax.random.normal(key, (1, 1, 768), jnp.float32)

    def __call__(self, mode, *args, **kwargs):
        if mode == "encode_value":
            return encode_value(*args, single_object=self.single_object, **kwargs)
        elif mode == "get_cls_token":
            return self.cls_token
        else:
            # TODO(synk): modes backed by convmae/decoder are not implementable
            # from the provided source alone.
            raise NotImplementedError(mode)


if __name__ == "__main__":
    bs, num_obj, H, W = 2, 4, 16, 16
    key = jax.random.PRNGKey(0)
    kf, km = jax.random.split(key)
    frame = jax.random.normal(kf, (bs, 3, H, W), jnp.float32)
    masks = jax.nn.sigmoid(jax.random.normal(km, (bs, num_obj, H, W), jnp.float32))

    # multi-object path
    model = JointFormerJax({"single_object": False})
    out = jax.block_until_ready(model("encode_value", frame, masks))
    ref = encode_value_reference(frame, masks, single_object=False)
    assert out.shape == (bs, num_obj, 5, H, W), out.shape
    assert jnp.allclose(out, ref, atol=1e-5, rtol=1e-5), "multi-object mismatch"

    # single-object path
    model_so = JointFormerJax({"single_object": True})
    out_so = jax.block_until_ready(model_so("encode_value", frame, masks))
    ref_so = encode_value_reference(frame, masks, single_object=True)
    assert out_so.shape == (bs, num_obj, 4, H, W), out_so.shape
    assert jnp.allclose(out_so, ref_so, atol=1e-5, rtol=1e-5), "single-object mismatch"

    # K == 1 path (zeroed 'others')
    out1 = jax.block_until_ready(model("encode_value", frame, masks[:, :1]))
    ref1 = encode_value_reference(frame, masks[:, :1], single_object=False)
    assert jnp.allclose(out1, ref1, atol=1e-5, rtol=1e-5), "K=1 mismatch"

    # cls_token path (plain parameter fetch)
    _ = jax.block_until_ready(model("get_cls_token"))

    print("KERNEL_OK")
</pallas_src>

<mosaic_0001>
module attributes {stable_mosaic.version = 11 : i64} {
  func.func @_encode_value_kernel(%arg0: i32, %arg1: i32, %arg2: memref<1x3x16x16xf32, #tpu.memory_space<vmem>>, %arg3: memref<1x4x16x16xf32, #tpu.memory_space<vmem>>, %arg4: memref<1x4x5x16x16xf32, #tpu.memory_space<vmem>>) attributes {dimension_semantics = [#tpu.dimension_semantics<parallel>, #tpu.dimension_semantics<parallel>], iteration_bounds = array<i64: 2, 1>, scalar_prefetch = 0 : i64, scratch_operands = 0 : i64, tpu.core_type = #tpu.core_type<tc>, window_params = [{transform_indices = @transform_0, window_bounds = array<i64: 1, 3, 16, 16>}, {transform_indices = @transform_1, window_bounds = array<i64: 1, 4, 16, 16>}, {transform_indices = @transform_2, window_bounds = array<i64: 1, 4, 5, 16, 16>}]} {
    %c0 = arith.constant 0 : index
    %c0_0 = arith.constant 0 : index
    %c0_1 = arith.constant 0 : index
    %c0_2 = arith.constant 0 : index
    %0 = vector.load %arg2[%c0, %c0_0, %c0_1, %c0_2] : memref<1x3x16x16xf32, #tpu.memory_space<vmem>>, vector<1x3x16x16xf32>
    %1 = vector.shape_cast %0 : vector<1x3x16x16xf32> to vector<3x16x16xf32>
    %c0_3 = arith.constant 0 : index
    %c0_4 = arith.constant 0 : index
    %c0_5 = arith.constant 0 : index
    %c0_6 = arith.constant 0 : index
    %2 = vector.load %arg3[%c0_3, %c0_4, %c0_5, %c0_6] : memref<1x4x16x16xf32, #tpu.memory_space<vmem>>, vector<1x4x16x16xf32>
    %3 = vector.shape_cast %2 : vector<1x4x16x16xf32> to vector<4x16x16xf32>
    %4 = vector.extract_strided_slice %3 {offsets = [0, 0, 0], sizes = [1, 16, 16], strides = [1, 1, 1]} : vector<4x16x16xf32> to vector<1x16x16xf32>
    %5 = vector.shape_cast %4 : vector<1x16x16xf32> to vector<16x16xf32>
    %6 = vector.extract_strided_slice %3 {offsets = [1, 0, 0], sizes = [1, 16, 16], strides = [1, 1, 1]} : vector<4x16x16xf32> to vector<1x16x16xf32>
    %7 = vector.shape_cast %6 : vector<1x16x16xf32> to vector<16x16xf32>
    %8 = arith.addf %5, %7 : vector<16x16xf32>
    %9 = vector.extract_strided_slice %3 {offsets = [2, 0, 0], sizes = [1, 16, 16], strides = [1, 1, 1]} : vector<4x16x16xf32> to vector<1x16x16xf32>
    %10 = vector.shape_cast %9 : vector<1x16x16xf32> to vector<16x16xf32>
    %11 = arith.addf %8, %10 : vector<16x16xf32>
    %12 = vector.extract_strided_slice %3 {offsets = [3, 0, 0], sizes = [1, 16, 16], strides = [1, 1, 1]} : vector<4x16x16xf32> to vector<1x16x16xf32>
    %13 = vector.shape_cast %12 : vector<1x16x16xf32> to vector<16x16xf32>
    %14 = arith.addf %11, %13 : vector<16x16xf32>
    %c0_7 = arith.constant 0 : index
    %c0_8 = arith.constant 0 : index
    %c0_9 = arith.constant 0 : index
    %c0_10 = arith.constant 0 : index
    %c0_11 = arith.constant 0 : index
    %15 = vector.load %arg4[%c0_7, %c0_8, %c0_9, %c0_10, %c0_11] : memref<1x4x5x16x16xf32, #tpu.memory_space<vmem>>, vector<1x1x3x16x16xf32>
    %16 = vector.shape_cast %15 : vector<1x1x3x16x16xf32> to vector<3x16x16xf32>
    %17 = vector.shape_cast %1 : vector<3x16x16xf32> to vector<1x1x3x16x16xf32>
    tpu.vector_store %arg4[%c0_7, %c0_8, %c0_9, %c0_10, %c0_11], %17 {strides = array<i32>} : memref<1x4x5x16x16xf32, #tpu.memory_space<vmem>>, vector<1x1x3x16x16xf32>,
    %18 = vector.extract_strided_slice %3 {offsets = [0, 0, 0], sizes = [1, 16, 16], strides = [1, 1, 1]} : vector<4x16x16xf32> to vector<1x16x16xf32>
    %19 = vector.shape_cast %18 : vector<1x16x16xf32> to vector<16x16xf32>
    %c0_12 = arith.constant 0 : index
    %c0_13 = arith.constant 0 : index
    %c3 = arith.constant 3 : index
    %c0_14 = arith.constant 0 : index
    %c0_15 = arith.constant 0 : index
    %20 = vector.load %arg4[%c0_12, %c0_13, %c3, %c0_14, %c0_15] : memref<1x4x5x16x16xf32, #tpu.memory_space<vmem>>, vector<1x1x1x16x16xf32>
    %21 = vector.shape_cast %20 : vector<1x1x1x16x16xf32> to vector<16x16xf32>
    %22 = vector.shape_cast %19 : vector<16x16xf32> to vector<1x1x1x16x16xf32>
    tpu.vector_store %arg4[%c0_12, %c0_13, %c3, %c0_14, %c0_15], %22 {strides = array<i32>} : memref<1x4x5x16x16xf32, #tpu.memory_space<vmem>>, vector<1x1x1x16x16xf32>,
    %23 = vector.extract_strided_slice %3 {offsets = [0, 0, 0], sizes = [1, 16, 16], strides = [1, 1, 1]} : vector<4x16x16xf32> to vector<1x16x16xf32>
    %24 = vector.shape_cast %23 : vector<1x16x16xf32> to vector<16x16xf32>
    %25 = arith.subf %14, %24 : vector<16x16xf32>
    %c0_16 = arith.constant 0 : index
    %c0_17 = arith.constant 0 : index
    %c4 = arith.constant 4 : index
    %c0_18 = arith.constant 0 : index
    %c0_19 = arith.constant 0 : index
    %26 = vector.load %arg4[%c0_16, %c0_17, %c4, %c0_18, %c0_19] : memref<1x4x5x16x16xf32, #tpu.memory_space<vmem>>, vector<1x1x1x16x16xf32>
    %27 = vector.shape_cast %26 : vector<1x1x1x16x16xf32> to vector<16x16xf32>
    %28 = vector.shape_cast %25 : vector<16x16xf32> to vector<1x1x1x16x16xf32>
    tpu.vector_store %arg4[%c0_16, %c0_17, %c4, %c0_18, %c0_19], %28 {strides = array<i32>} : memref<1x4x5x16x16xf32, #tpu.memory_space<vmem>>, vector<1x1x1x16x16xf32>,
    %c0_20 = arith.constant 0 : index
    %c1 = arith.constant 1 : index
    %c0_21 = arith.constant 0 : index
    %c0_22 = arith.constant 0 : index
    %c0_23 = arith.constant 0 : index
    %29 = vector.load %arg4[%c0_20, %c1, %c0_21, %c0_22, %c0_23] : memref<1x4x5x16x16xf32, #tpu.memory_space<vmem>>, vector<1x1x3x16x16xf32>
    %30 = vector.shape_cast %29 : vector<1x1x3x16x16xf32> to vector<3x16x16xf32>
    %31 = vector.shape_cast %1 : vector<3x16x16xf32> to vector<1x1x3x16x16xf32>
    tpu.vector_store %arg4[%c0_20, %c1, %c0_21, %c0_22, %c0_23], %31 {strides = array<i32>} : memref<1x4x5x16x16xf32, #tpu.memory_space<vmem>>, vector<1x1x3x16x16xf32>,
    %32 = vector.extract_strided_slice %3 {offsets = [1, 0, 0], sizes = [1, 16, 16], strides = [1, 1, 1]} : vector<4x16x16xf32> to vector<1x16x16xf32>
    %33 = vector.shape_cast %32 : vector<1x16x16xf32> to vector<16x16xf32>
    %c0_24 = arith.constant 0 : index
    %c1_25 = arith.constant 1 : index
    %c3_26 = arith.constant 3 : index
    %c0_27 = arith.constant 0 : index
    %c0_28 = arith.constant 0 : index
    %34 = vector.load %arg4[%c0_24, %c1_25, %c3_26, %c0_27, %c0_28] : memref<1x4x5x16x16xf32, #tpu.memory_space<vmem>>, vector<1x1x1x16x16xf32>
    %35 = vector.shape_cast %34 : vector<1x1x1x16x16xf32> to vector<16x16xf32>
    %36 = vector.shape_cast %33 : vector<16x16xf32> to vector<1x1x1x16x16xf32>
    tpu.vector_store %arg4[%c0_24, %c1_25, %c3_26, %c0_27, %c0_28], %36 {strides = array<i32>} : memref<1x4x5x16x16xf32, #tpu.memory_space<vmem>>, vector<1x1x1x16x16xf32>,
    %37 = vector.extract_strided_slice %3 {offsets = [1, 0, 0], sizes = [1, 16, 16], strides = [1, 1, 1]} : vector<4x16x16xf32> to vector<1x16x16xf32>
    %38 = vector.shape_cast %37 : vector<1x16x16xf32> to vector<16x16xf32>
    %39 = arith.subf %14, %38 : vector<16x16xf32>
    %c0_29 = arith.constant 0 : index
    %c1_30 = arith.constant 1 : index
    %c4_31 = arith.constant 4 : index
    %c0_32 = arith.constant 0 : index
    %c0_33 = arith.constant 0 : index
    %40 = vector.load %arg4[%c0_29, %c1_30, %c4_31, %c0_32, %c0_33] : memref<1x4x5x16x16xf32, #tpu.memory_space<vmem>>, vector<1x1x1x16x16xf32>
    %41 = vector.shape_cast %40 : vector<1x1x1x16x16xf32> to vector<16x16xf32>
    %42 = vector.shape_cast %39 : vector<16x16xf32> to vector<1x1x1x16x16xf32>
    tpu.vector_store %arg4[%c0_29, %c1_30, %c4_31, %c0_32, %c0_33], %42 {strides = array<i32>} : memref<1x4x5x16x16xf32, #tpu.memory_space<vmem>>, vector<1x1x1x16x16xf32>,
    %c0_34 = arith.constant 0 : index
    %c2 = arith.constant 2 : index
    %c0_35 = arith.constant 0 : index
    %c0_36 = arith.constant 0 : index
    %c0_37 = arith.constant 0 : index
    %43 = vector.load %arg4[%c0_34, %c2, %c0_35, %c0_36, %c0_37] : memref<1x4x5x16x16xf32, #tpu.memory_space<vmem>>, vector<1x1x3x16x16xf32>
    %44 = vector.shape_cast %43 : vector<1x1x3x16x16xf32> to vector<3x16x16xf32>
    %45 = vector.shape_cast %1 : vector<3x16x16xf32> to vector<1x1x3x16x16xf32>
    tpu.vector_store %arg4[%c0_34, %c2, %c0_35, %c0_36, %c0_37], %45 {strides = array<i32>} : memref<1x4x5x16x16xf32, #tpu.memory_space<vmem>>, vector<1x1x3x16x16xf32>,
    %46 = vector.extract_strided_slice %3 {offsets = [2, 0, 0], sizes = [1, 16, 16], strides = [1, 1, 1]} : vector<4x16x16xf32> to vector<1x16x16xf32>
    %47 = vector.shape_cast %46 : vector<1x16x16xf32> to vector<16x16xf32>
    %c0_38 = arith.constant 0 : index
    %c2_39 = arith.constant 2 : index
    %c3_40 = arith.constant 3 : index
    %c0_41 = arith.constant 0 : index
    %c0_42 = arith.constant 0 : index
    %48 = vector.load %arg4[%c0_38, %c2_39, %c3_40, %c0_41, %c0_42] : memref<1x4x5x16x16xf32, #tpu.memory_space<vmem>>, vector<1x1x1x16x16xf32>
    %49 = vector.shape_cast %48 : vector<1x1x1x16x16xf32> to vector<16x16xf32>
    %50 = vector.shape_cast %47 : vector<16x16xf32> to vector<1x1x1x16x16xf32>
    tpu.vector_store %arg4[%c0_38, %c2_39, %c3_40, %c0_41, %c0_42], %50 {strides = array<i32>} : memref<1x4x5x16x16xf32, #tpu.memory_space<vmem>>, vector<1x1x1x16x16xf32>,
    %51 = vector.extract_strided_slice %3 {offsets = [2, 0, 0], sizes = [1, 16, 16], strides = [1, 1, 1]} : vector<4x16x16xf32> to vector<1x16x16xf32>
    %52 = vector.shape_cast %51 : vector<1x16x16xf32> to vector<16x16xf32>
    %53 = arith.subf %14, %52 : vector<16x16xf32>
    %c0_43 = arith.constant 0 : index
    %c2_44 = arith.constant 2 : index
    %c4_45 = arith.constant 4 : index
    %c0_46 = arith.constant 0 : index
    %c0_47 = arith.constant 0 : index
    %54 = vector.load %arg4[%c0_43, %c2_44, %c4_45, %c0_46, %c0_47] : memref<1x4x5x16x16xf32, #tpu.memory_space<vmem>>, vector<1x1x1x16x16xf32>
    %55 = vector.shape_cast %54 : vector<1x1x1x16x16xf32> to vector<16x16xf32>
    %56 = vector.shape_cast %53 : vector<16x16xf32> to vector<1x1x1x16x16xf32>
    tpu.vector_store %arg4[%c0_43, %c2_44, %c4_45, %c0_46, %c0_47], %56 {strides = array<i32>} : memref<1x4x5x16x16xf32, #tpu.memory_space<vmem>>, vector<1x1x1x16x16xf32>,
    %c0_48 = arith.constant 0 : index
    %c3_49 = arith.constant 3 : index
    %c0_50 = arith.constant 0 : index
    %c0_51 = arith.constant 0 : index
    %c0_52 = arith.constant 0 : index
    %57 = vector.load %arg4[%c0_48, %c3_49, %c0_50, %c0_51, %c0_52] : memref<1x4x5x16x16xf32, #tpu.memory_space<vmem>>, vector<1x1x3x16x16xf32>
    %58 = vector.shape_cast %57 : vector<1x1x3x16x16xf32> to vector<3x16x16xf32>
    %59 = vector.shape_cast %1 : vector<3x16x16xf32> to vector<1x1x3x16x16xf32>
    tpu.vector_store %arg4[%c0_48, %c3_49, %c0_50, %c0_51, %c0_52], %59 {strides = array<i32>} : memref<1x4x5x16x16xf32, #tpu.memory_space<vmem>>, vector<1x1x3x16x16xf32>,
    %60 = vector.extract_strided_slice %3 {offsets = [3, 0, 0], sizes = [1, 16, 16], strides = [1, 1, 1]} : vector<4x16x16xf32> to vector<1x16x16xf32>
    %61 = vector.shape_cast %60 : vector<1x16x16xf32> to vector<16x16xf32>
    %c0_53 = arith.constant 0 : index
    %c3_54 = arith.constant 3 : index
    %c3_55 = arith.constant 3 : index
    %c0_56 = arith.constant 0 : index
    %c0_57 = arith.constant 0 : index
    %62 = vector.load %arg4[%c0_53, %c3_54, %c3_55, %c0_56, %c0_57] : memref<1x4x5x16x16xf32, #tpu.memory_space<vmem>>, vector<1x1x1x16x16xf32>
    %63 = vector.shape_cast %62 : vector<1x1x1x16x16xf32> to vector<16x16xf32>
    %64 = vector.shape_cast %61 : vector<16x16xf32> to vector<1x1x1x16x16xf32>
    tpu.vector_store %arg4[%c0_53, %c3_54, %c3_55, %c0_56, %c0_57], %64 {strides = array<i32>} : memref<1x4x5x16x16xf32, #tpu.memory_space<vmem>>, vector<1x1x1x16x16xf32>,
    %65 = vector.extract_strided_slice %3 {offsets = [3, 0, 0], sizes = [1, 16, 16], strides = [1, 1, 1]} : vector<4x16x16xf32> to vector<1x16x16xf32>
    %66 = vector.shape_cast %65 : vector<1x16x16xf32> to vector<16x16xf32>
    %67 = arith.subf %14, %66 : vector<16x16xf32>
    %c0_58 = arith.constant 0 : index
    %c3_59 = arith.constant 3 : index
    %c4_60 = arith.constant 4 : index
    %c0_61 = arith.constant 0 : index
    %c0_62 = arith.constant 0 : index
    %68 = vector.load %arg4[%c0_58, %c3_59, %c4_60, %c0_61, %c0_62] : memref<1x4x5x16x16xf32, #tpu.memory_space<vmem>>, vector<1x1x1x16x16xf32>
    %69 = vector.shape_cast %68 : vector<1x1x1x16x16xf32> to vector<16x16xf32>
    %70 = vector.shape_cast %67 : vector<16x16xf32> to vector<1x1x1x16x16xf32>
    tpu.vector_store %arg4[%c0_58, %c3_59, %c4_60, %c0_61, %c0_62], %70 {strides = array<i32>} : memref<1x4x5x16x16xf32, #tpu.memory_space<vmem>>, vector<1x1x1x16x16xf32>,
    return
  }
  func.func @transform_0(%arg0: i32, %arg1: i32) -> (i32, i32, i32, i32) {
    %c0_i32 = arith.constant 0 : i32
    %c0_i32_0 = arith.constant 0 : i32
    %c0_i32_1 = arith.constant 0 : i32
    return %arg0, %c0_i32, %arg1, %c0_i32_0 : i32, i32, i32, i32
  }
  func.func @transform_1(%arg0: i32, %arg1: i32) -> (i32, i32, i32, i32) {
    %c0_i32 = arith.constant 0 : i32
    %c0_i32_0 = arith.constant 0 : i32
    %c0_i32_1 = arith.constant 0 : i32
    return %arg0, %c0_i32, %arg1, %c0_i32_0 : i32, i32, i32, i32
  }
  func.func @transform_2(%arg0: i32, %arg1: i32) -> (i32, i32, i32, i32, i32) {
    %c0_i32 = arith.constant 0 : i32
    %c0_i32_0 = arith.constant 0 : i32
    %c0_i32_1 = arith.constant 0 : i32
    %c0_i32_2 = arith.constant 0 : i32
    return %arg0, %c0_i32, %c0_i32_0, %arg1, %c0_i32_1 : i32, i32, i32, i32, i32
  }
}

</mosaic_0001>

<llo_original>
// kernel: tpu_custom_call.1
$region0: #{tpu_custom_call.1}
  #allocation0 [shape = 'u32[]', space=smem, size = 0x4, offset = 0x4, fixed_abs, tag = 'smem constant byte address 0x4 - core index']
  #allocation1 [shape = 'u32[144,128]{1,0:T(1,128)}', space=vmem, size = 0x12000, scoped, tag = 'internal scratch']
  %s0 = inlined_call_operand.hbm [shape: f32[2,3,16,16], index: 0, kind: input, shape index: {}]
  %s1 = inlined_call_operand.hbm [shape: f32[2,4,16,16], index: 1, kind: input, shape index: {}]
  %s2 = inlined_call_operand.hbm [shape: f32[2,4,5,16,16], index: 2, kind: output, shape index: {}]
  %s3 = sld [smem:[#allocation0]]
  $region49: #{tpu_custom_call.1} parent=0
    _
  %s5 = ssub.s32 1, %s3
  %s6 = scalar_select 0, %s5, %s3
  $region1: #{tpu_custom_call.1} parent=0
    #allocation2 [shape = 'u8[49152]{0}', space=vmem, size = 0xc000, scoped, tag = 'input window, operand 0']
    #allocation3 [shape = 's32[2]{0}', space=sflag, size = 0x8, scoped, tag = 'scoped memory for tpu_custom_call.1']
    #allocation4 [shape = 's32[2]{0}', space=sflag, size = 0x8, scoped, tag = 'scoped memory for tpu_custom_call.1']
    #allocation5 [shape = 'u8[65536]{0}', space=vmem, size = 0x10000, scoped, tag = 'input window, operand 1']
    #allocation6 [shape = 's32[2]{0}', space=sflag, size = 0x8, scoped, tag = 'scoped memory for tpu_custom_call.1']
    #allocation7 [shape = 'u8[327680]{0}', space=vmem, size = 0x50000, scoped, tag = 'output window, operand 0']
    %7 = vsyncpa [#allocation3], 0
    %s8 = scalar_lea.sflag [#allocation3], 1
    %9 = vsyncpa %s8, 0
    %10 = vsyncpa [#allocation6], 0
    %s11 = scalar_lea.sflag [#allocation6], 1
    %12 = vsyncpa %s11, 0
    %13 = vsyncpa [#allocation4], 0
    %s14 = scalar_lea.sflag [#allocation4], 1
    %15 = vsyncpa %s14, 0
    loop: start=0, step=1, limit=4
    $region2: #{tpu_custom_call.1} parent=1 // loop_pre_header
      _
    $region3: #{tpu_custom_call.1} parent=1 // loop_header
      %s17 = sphi 0, %s21
      %p18 = scmp.ge.s32.totalorder %s17, 4
      %s24 = sphi 0, %s36
      %s25 = sphi 0, %s32
      %s26 = sphi 0, %s24
      %s27 = sphi 0, %s25
      %s28 = sphi 0, %s26
      %s29 = sphi 0, %s27
      %s41 = sphi 0, %s43
      %s44 = sphi 0, %s41
      %s45 = sphi 0, %s44
      %s61 = sphi 0, %s45
      %s69 = sphi 0, %s71
      %s72 = sphi 0, %s69
      %s73 = sphi 0, %s72
      %s89 = sphi 0, %s73
      %s97 = sphi 0, %s99
      %s100 = sphi 0, %s97
      %s101 = sphi 0, %s100
      %s117 = sphi 0, %s101
    $region4: #{tpu_custom_call.1} parent=1 // loop_header_branch
      %20 = sbr.rel (%p18) target = $region8
    $region5: #{tpu_custom_call.1} parent=1 // loop_body
      %s22 = ssub.s32 %s17, 1
      %s23 = ssub.s32 %s17, 2
      %s30 = sadd.s32 1, %s25
      %p31 = scmp.ge.s32.totalorder %s30, 1
      %s32 = scalar_select %p31, 0, %s30
      %s33 = sadd.s32 1, %s24
      %s34 = scalar_select %p31, %s33, %s24
      %p35 = scmp.ge.s32.totalorder %s34, 2
      %s36 = scalar_select %p35, 0, %s34
      %s37 = ssub.s32 %s24, %s36
      %s38 = ssub.s32 %s25, %s32
      %s39 = sor.u32 %s37, %s38
      %p40 = scmp.eq.s32.totalorder %s39, 0
      %s42 = sadd.s32 %s41, 1
      %s43 = scalar_select %p40, %s41, %s42
      %p46 = pneg %p40
      %p47 = scmp.eq.s32.totalorder %s17, 1
      %p48 = por %p46, %p47
      %p49 = scmp.ne.s32.totalorder %s41, %s44
      %p50 = scmp.eq.s32.totalorder %s17, 0
      %p51 = por %p49, %p50
      %p52 = scmp.ne.s32.totalorder %s41, %s44
      %p53 = scmp.eq.s32.totalorder %s22, 1
      %p54 = por %p52, %p53
      %p55 = scmp.ne.s32.totalorder %s44, %s45
      %p56 = scmp.eq.s32.totalorder %s22, 0
      %p57 = por %p55, %p56
      %p58 = scmp.ne.s32.totalorder %s44, %s45
      %p59 = scmp.eq.s32.totalorder %s23, 1
      %p60 = por %p58, %p59
      %p62 = scmp.ne.s32.totalorder %s45, %s61
      %p63 = scmp.eq.s32.totalorder %s23, 0
      %p64 = por %p62, %p63
      %s65 = ssub.s32 %s24, %s36
      %s66 = ssub.s32 %s25, %s32
      %s67 = sor.u32 %s65, %s66
      %p68 = scmp.eq.s32.totalorder %s67, 0
      %s70 = sadd.s32 %s69, 1
      %s71 = scalar_select %p68, %s69, %s70
      %p74 = pneg %p68
      %p75 = scmp.eq.s32.totalorder %s17, 1
      %p76 = por %p74, %p75
      %p77 = scmp.ne.s32.totalorder %s69, %s72
      %p78 = scmp.eq.s32.totalorder %s17, 0
      %p79 = por %p77, %p78
      %p80 = scmp.ne.s32.totalorder %s69, %s72
      %p81 = scmp.eq.s32.totalorder %s22, 1
      %p82 = por %p80, %p81
      %p83 = scmp.ne.s32.totalorder %s72, %s73
      %p84 = scmp.eq.s32.totalorder %s22, 0
      %p85 = por %p83, %p84
      %p86 = scmp.ne.s32.totalorder %s72, %s73
      %p87 = scmp.eq.s32.totalorder %s23, 1
      %p88 = por %p86, %p87
      %p90 = scmp.ne.s32.totalorder %s73, %s89
      %p91 = scmp.eq.s32.totalorder %s23, 0
      %p92 = por %p90, %p91
      %s93 = ssub.s32 %s24, %s36
      %s94 = ssub.s32 %s25, %s32
      %s95 = sor.u32 %s93, %s94
      %p96 = scmp.eq.s32.totalorder %s95, 0
      %s98 = sadd.s32 %s97, 1
      %s99 = scalar_select %p96, %s97, %s98
      %p102 = pneg %p96
      %p103 = scmp.eq.s32.totalorder %s17, 1
      %p104 = por %p102, %p103
      %p105 = scmp.ne.s32.totalorder %s97, %s100
      %p106 = scmp.eq.s32.totalorder %s17, 0
      %p107 = por %p105, %p106
      %p108 = scmp.ne.s32.totalorder %s97, %s100
      %p109 = scmp.eq.s32.totalorder %s22, 1
      %p110 = por %p108, %p109
      %p111 = scmp.ne.s32.totalorder %s100, %s101
      %p112 = scmp.eq.s32.totalorder %s22, 0
      %p113 = por %p111, %p112
      %p114 = scmp.ne.s32.totalorder %s100, %s101
      %p115 = scmp.eq.s32.totalorder %s23, 1
      %p116 = por %p114, %p115
      %p118 = scmp.ne.s32.totalorder %s101, %s117
      %p119 = scmp.eq.s32.totalorder %s23, 0
      %p120 = por %p118, %p119
      %p121 = scmp.le.s32.totalorder 1, %s17
      %p122 = scmp.lt.s32.totalorder %s17, 3
      %p123 = pnand %p121, %p122
      %p124 = pneg %p123
      // Predicated region
      $region9: #{tpu_custom_call.1} parent=5 // pred_check
        _
      $region10: #{tpu_custom_call.1} parent=5 // pred_check_branch
        %126 = sbr.rel (%p123) target = $region12
      $region11: #{tpu_custom_call.1} parent=5 // pred_region
        %s127 = ssub.s32 %s17, 1
      $region12: #{tpu_custom_call.1} parent=5 // pred_fallthru
        _
      %p128 = scmp.lt.s32.totalorder %s17, 2
      // Predicated region
      $region13: #{tpu_custom_call.1} parent=5 // pred_check
        %p129 = pneg %p128
      $region14: #{tpu_custom_call.1} parent=5 // pred_check_branch
        %131 = sbr.rel (%p129) target = $region16
      $region15: #{tpu_custom_call.1} parent=5 // pred_region
        // Predicated region
        $region17: #{tpu_custom_call.1} parent=15 // pred_check
          %p132 = pneg %p51
        $region18: #{tpu_custom_call.1} parent=15 // pred_check_branch
          %134 = sbr.rel (%p132) target = $region20
        $region19: #{tpu_custom_call.1} parent=15 // pred_region
          %s135 = sand.u32 %s41, 1
          %s136 = scalar_lea.sflag [#allocation3], %s135
          %s137 = sand.u32 %s41, 1
          %s138 = smul.addr %s137, 48
          %s139 = scalar_lea.vmem [#allocation2], %s138
          %s140 = smul.u32 2, %s25
          %s142 = ssub.s32 768, 768
          %143 = vsyncadd %s136, %s142
          %s144 = smul.addr %s24, 6
          %s145 = sadd.s32 %s140, %s144
          %s146 = smul.addr %s145, 128
          %s147 = scalar_lea.hbm %s0, %s146
          %s148 = sshll.u32 %s139, 4
          %s149 = int_to_ptr.vmem [resolvable:$true] %s148
          %154 = dma.hbm_to_vmem [thread:$0]  %s147, 768, %s149, %s136, 128, 128, 8
        $region20: #{tpu_custom_call.1} parent=15 // pred_fallthru
          _
        // Predicated region
        $region21: #{tpu_custom_call.1} parent=15 // pred_check
          %p155 = pneg %p79
        $region22: #{tpu_custom_call.1} parent=15 // pred_check_branch
          %157 = sbr.rel (%p155) target = $region24
        $region23: #{tpu_custom_call.1} parent=15 // pred_region
          %s158 = sand.u32 %s69, 1
          %s159 = scalar_lea.sflag [#allocation6], %s158
          %s160 = sand.u32 %s69, 1
          %s161 = smul.addr %s160, 64
          %s162 = scalar_lea.vmem [#allocation5], %s161
          %s163 = smul.u32 2, %s25
          %s165 = ssub.s32 1024, 1024
          %166 = vsyncadd %s159, %s165
          %s167 = smul.addr %s24, 8
          %s168 = sadd.s32 %s163, %s167
          %s169 = smul.addr %s168, 128
          %s170 = scalar_lea.hbm %s1, %s169
          %s171 = sshll.u32 %s162, 4
          %s172 = int_to_ptr.vmem [resolvable:$true] %s171
          %177 = dma.hbm_to_vmem [thread:$0]  %s170, 1024, %s172, %s159, 128, 128, 8
        $region24: #{tpu_custom_call.1} parent=15 // pred_fallthru
          _
      $region16: #{tpu_custom_call.1} parent=5 // pred_fallthru
        _
      %p178 = scmp.le.s32.totalorder 1, %s17
      %p179 = scmp.lt.s32.totalorder %s17, 3
      %p180 = pnand %p178, %p179
      %p181 = pneg %p180
      // Predicated region
      $region25: #{tpu_custom_call.1} parent=5 // pred_check
        _
      $region26: #{tpu_custom_call.1} parent=5 // pred_check_branch
        %183 = sbr.rel (%p180) target = $region28
      $region27: #{tpu_custom_call.1} parent=5 // pred_region
        %s184 = ssub.s32 %s17, 1
        %s185 = sand.u32 %s44, 1
        %s186 = scalar_lea.sflag [#allocation3], %s185
        %s187 = sand.u32 %s44, 1
        %s188 = smul.addr %s187, 48
        %s189 = scalar_lea.vmem [#allocation2], %s188
        // Predicated region
        $region29: #{tpu_custom_call.1} parent=27 // pred_check
          %p190 = pneg %p57
        $region30: #{tpu_custom_call.1} parent=27 // pred_check_branch
          %192 = sbr.rel (%p190) target = $region32
        $region31: #{tpu_custom_call.1} parent=27 // pred_region
          %193 = dma.done %s186, 768
        $region32: #{tpu_custom_call.1} parent=27 // pred_fallthru
          _
        %s194 = sand.u32 %s72, 1
        %s195 = scalar_lea.sflag [#allocation6], %s194
        %s196 = sand.u32 %s72, 1
        %s197 = smul.addr %s196, 64
        %s198 = scalar_lea.vmem [#allocation5], %s197
        // Predicated region
        $region33: #{tpu_custom_call.1} parent=27 // pred_check
          %p199 = pneg %p85
        $region34: #{tpu_custom_call.1} parent=27 // pred_check_branch
          %201 = sbr.rel (%p199) target = $region36
        $region35: #{tpu_custom_call.1} parent=27 // pred_region
          %202 = dma.done %s195, 1024
        $region36: #{tpu_custom_call.1} parent=27 // pred_fallthru
          _
        %s203 = sand.u32 %s44, 1
        %s204 = scalar_lea.sflag [#allocation3], %s203
        %s205 = sand.u32 %s44, 1
        %s206 = smul.addr %s205, 48
        %s207 = scalar_lea.vmem [#allocation2], %s206
        %p208 = pneg %p57
        %p209 = pneg %p54
        %s210 = sand.u32 %s72, 1
        %s211 = scalar_lea.sflag [#allocation6], %s210
        %s212 = sand.u32 %s72, 1
        %s213 = smul.addr %s212, 64
        %s214 = scalar_lea.vmem [#allocation5], %s213
        %p215 = pneg %p85
        %p216 = pneg %p82
        %p217 = pneg %p113
        %p218 = pneg %p110
        %s219 = sand.u32 %s100, 1
        %s220 = scalar_lea.sflag [#allocation4], %s219
        %s221 = sand.u32 %s100, 1
        %s222 = smul.addr %s221, 320
        %s223 = scalar_lea.vmem [#allocation7], %s222
        %s224 = smul.u32 2, %s27
        %s225 = smul.u32 2, %s27
        %s226 = smul.u32 2, %s27
        %v227 = vld [vmem:[%s189] sm:$0xff]
        %v228 = vld [vmem:[%s189 + $0x8] sm:$0xff]
        %v229 = vld [vmem:[%s189 + $0x10] sm:$0xff]
        %v230 = vld [vmem:[%s189 + $0x18] sm:$0xff]
        %v231 = vld [vmem:[%s189 + $0x20] sm:$0xff]
        %v232 = vld [vmem:[%s189 + $0x28] sm:$0xff]
        %v233 = vld [vmem:[%s198] sm:$0xff]
        %v234 = vld [vmem:[%s198 + $0x8] sm:$0xff]
        %v235 = vld [vmem:[%s198 + $0x10] sm:$0xff]
        %v236 = vld [vmem:[%s198 + $0x18] sm:$0xff]
        %v237 = vld [vmem:[%s198 + $0x20] sm:$0xff]
        %v238 = vld [vmem:[%s198 + $0x28] sm:$0xff]
        %v239 = vld [vmem:[%s198 + $0x30] sm:$0xff]
        %v240 = vld [vmem:[%s198 + $0x38] sm:$0xff]
        %v241 = vadd.f32 %v233, %v235
        %v242 = vadd.f32 %v234, %v236
        %v243 = vadd.f32 %v241, %v237
        %v244 = vadd.f32 %v242, %v238
        %v245 = vadd.f32 %v243, %v239
        %v246 = vadd.f32 %v244, %v240
        %vm247 = vcmask 130048
        %248 = vst.msk [vmem:[%s223] sm:$0xff] %vm247, %v227
        %249 = vst.msk [vmem:[%s223 + $0x8] sm:$0xff] %vm247, %v228
        %250 = vst.msk [vmem:[%s223 + $0x10] sm:$0xff] %vm247, %v229
        %251 = vst.msk [vmem:[%s223 + $0x18] sm:$0xff] %vm247, %v230
        %252 = vst.msk [vmem:[%s223 + $0x20] sm:$0xff] %vm247, %v231
        %253 = vst.msk [vmem:[%s223 + $0x28] sm:$0xff] %vm247, %v232
        %s254 = scalar_lea.vmem %s223, 48 [#allocation7]
        %255 = vst.msk [vmem:[%s254] sm:$0xff] %vm247, %v233
        %256 = vst.msk [vmem:[%s254 + $0x8] sm:$0xff] %vm247, %v234
        %v257 = vsub.f32 %v245, %v233
        %v258 = vsub.f32 %v246, %v234
        %s259 = scalar_lea.vmem %s223, 64 [#allocation7]
        %260 = vst.msk [vmem:[%s259] sm:$0xff] %vm247, %v257
        %261 = vst.msk [vmem:[%s259 + $0x8] sm:$0xff] %vm247, %v258
        %s262 = scalar_lea.vmem %s223, 80 [#allocation7]
        %263 = vst.msk [vmem:[%s262] sm:$0xff] %vm247, %v227
        %264 = vst.msk [vmem:[%s262 + $0x8] sm:$0xff] %vm247, %v228
        %265 = vst.msk [vmem:[%s262 + $0x10] sm:$0xff] %vm247, %v229
        %266 = vst.msk [vmem:[%s262 + $0x18] sm:$0xff] %vm247, %v230
        %267 = vst.msk [vmem:[%s262 + $0x20] sm:$0xff] %vm247, %v231
        %268 = vst.msk [vmem:[%s262 + $0x28] sm:$0xff] %vm247, %v232
        %s269 = scalar_lea.vmem %s223, 128 [#allocation7]
        %270 = vst.msk [vmem:[%s269] sm:$0xff] %vm247, %v235
        %271 = vst.msk [vmem:[%s269 + $0x8] sm:$0xff] %vm247, %v236
        %v272 = vsub.f32 %v245, %v235
        %v273 = vsub.f32 %v246, %v236
        %s274 = scalar_lea.vmem %s223, 144 [#allocation7]
        %275 = vst.msk [vmem:[%s274] sm:$0xff] %vm247, %v272
        %276 = vst.msk [vmem:[%s274 + $0x8] sm:$0xff] %vm247, %v273
        %s277 = scalar_lea.vmem %s223, 160 [#allocation7]
        %278 = vst.msk [vmem:[%s277] sm:$0xff] %vm247, %v227
        %279 = vst.msk [vmem:[%s277 + $0x8] sm:$0xff] %vm247, %v228
        %280 = vst.msk [vmem:[%s277 + $0x10] sm:$0xff] %vm247, %v229
        %281 = vst.msk [vmem:[%s277 + $0x18] sm:$0xff] %vm247, %v230
        %282 = vst.msk [vmem:[%s277 + $0x20] sm:$0xff] %vm247, %v231
        %283 = vst.msk [vmem:[%s277 + $0x28] sm:$0xff] %vm247, %v232
        %s284 = scalar_lea.vmem %s223, 208 [#allocation7]
        %285 = vst.msk [vmem:[%s284] sm:$0xff] %vm247, %v237
        %286 = vst.msk [vmem:[%s284 + $0x8] sm:$0xff] %vm247, %v238
        %v287 = vsub.f32 %v245, %v237
        %v288 = vsub.f32 %v246, %v238
        %s289 = scalar_lea.vmem %s223, 224 [#allocation7]
        %290 = vst.msk [vmem:[%s289] sm:$0xff] %vm247, %v287
        %291 = vst.msk [vmem:[%s289 + $0x8] sm:$0xff] %vm247, %v288
        %s292 = scalar_lea.vmem %s223, 240 [#allocation7]
        %293 = vst.msk [vmem:[%s292] sm:$0xff] %vm247, %v227
        %294 = vst.msk [vmem:[%s292 + $0x8] sm:$0xff] %vm247, %v228
        %295 = vst.msk [vmem:[%s292 + $0x10] sm:$0xff] %vm247, %v229
        %296 = vst.msk [vmem:[%s292 + $0x18] sm:$0xff] %vm247, %v230
        %297 = vst.msk [vmem:[%s292 + $0x20] sm:$0xff] %vm247, %v231
        %298 = vst.msk [vmem:[%s292 + $0x28] sm:$0xff] %vm247, %v232
        %s299 = scalar_lea.vmem %s223, 288 [#allocation7]
        %300 = vst.msk [vmem:[%s299] sm:$0xff] %vm247, %v239
        %301 = vst.msk [vmem:[%s299 + $0x8] sm:$0xff] %vm247, %v240
        %v302 = vsub.f32 %v245, %v239
        %v303 = vsub.f32 %v246, %v240
        %s304 = scalar_lea.vmem %s223, 304 [#allocation7]
        %305 = vst.msk [vmem:[%s304] sm:$0xff] %vm247, %v302
        %306 = vst.msk [vmem:[%s304 + $0x8] sm:$0xff] %vm247, %v303
        %s307 = sand.u32 %s100, 1
        %s308 = scalar_lea.sflag [#allocation4], %s307
        %s309 = sand.u32 %s100, 1
        %s310 = smul.addr %s309, 320
        %s311 = scalar_lea.vmem [#allocation7], %s310
        // Predicated region
        $region37: #{tpu_custom_call.1} parent=27 // pred_check
          %p312 = pneg %p110
        $region38: #{tpu_custom_call.1} parent=27 // pred_check_branch
          %314 = sbr.rel (%p312) target = $region40
        $region39: #{tpu_custom_call.1} parent=27 // pred_region
          %s315 = smul.u32 2, %s27
          %s317 = ssub.s32 5120, 5120
          %318 = vsyncadd %s308, %s317
          %s319 = smul.addr %s26, 40
          %s320 = sadd.s32 %s315, %s319
          %s321 = smul.addr %s320, 128
          %s322 = scalar_lea.hbm %s2, %s321
          %s323 = sshll.u32 %s311, 4
          %s324 = int_to_ptr.vmem [resolvable:$true] %s323
          %329 = dma.vmem_to_hbm [thread:$0]  %s324, 5120, %s322, %s308, 128, 128, 8
        $region40: #{tpu_custom_call.1} parent=27 // pred_fallthru
          _
      $region28: #{tpu_custom_call.1} parent=5 // pred_fallthru
        _
      %p330 = scmp.le.s32.totalorder 2, %s17
      // Predicated region
      $region41: #{tpu_custom_call.1} parent=5 // pred_check
        %p331 = pneg %p330
      $region42: #{tpu_custom_call.1} parent=5 // pred_check_branch
        %333 = sbr.rel (%p331) target = $region44
      $region43: #{tpu_custom_call.1} parent=5 // pred_region
        %s334 = ssub.s32 %s17, 2
        // Predicated region
        $region45: #{tpu_custom_call.1} parent=43 // pred_check
          %p335 = pneg %p116
        $region46: #{tpu_custom_call.1} parent=43 // pred_check_branch
          %337 = sbr.rel (%p335) target = $region48
        $region47: #{tpu_custom_call.1} parent=43 // pred_region
          %s338 = sand.u32 %s101, 1
          %s339 = scalar_lea.sflag [#allocation4], %s338
          %s340 = sand.u32 %s101, 1
          %s341 = smul.addr %s340, 320
          %s342 = scalar_lea.vmem [#allocation7], %s341
          %343 = dma.done %s339, 5120
        $region48: #{tpu_custom_call.1} parent=43 // pred_fallthru
          _
      $region44: #{tpu_custom_call.1} parent=5 // pred_fallthru
        _
    $region6: #{tpu_custom_call.1} parent=1 // loop_footer
      %s21 = sadd.s32 1, %s17
    $region7: #{tpu_custom_call.1} parent=1 // loop_footer_branch
      %16 = sbr.rel target = $region3
    $region8: #{tpu_custom_call.1} parent=1 // loop_exit
      _
    %344 = vsyncpa [#allocation3], 1
    %s345 = scalar_lea.sflag [#allocation3], 1
    %346 = vsyncpa %s345, 1
    %347 = vsyncpa [#allocation6], 1
    %s348 = scalar_lea.sflag [#allocation6], 1
    %349 = vsyncpa %s348, 1
    %350 = vsyncpa [#allocation4], 1
    %s351 = scalar_lea.sflag [#allocation4], 1
    %352 = vsyncpa %s351, 1

</llo_original>
